<compile_context>
chip_gen: v6e
topology: v6e:2x2x1
jax: 0.10.0
libtpu: 0.0.40
codegen_flags: <defaults>
</compile_context>

<pallas_src>
import functools

import jax
import jax.numpy as jnp
from jax.experimental import pallas as pl
from jax.experimental.pallas import tpu as pltpu

_TARGET_TILE_BYTES = 4 * 1024 * 1024   # per input buffer (conservative, lane-padded)
_MIN_GRID_STEPS = 4                    # v7x: 2 TensorCores + input pipelining


def _sisdr_kernel(inp_ref, tgt_ref, out_ref, *, eps):
    """SI-SDR for a (block_rows, W) tile; one SDR value per row (window)."""
    x = inp_ref[...].astype(jnp.float32)   # (bc, W)
    t = tgt_ref[...].astype(jnp.float32)   # (bc, W)

    # Per-window reductions along the lane (W) axis -> (bc, 1).
    Rss = jnp.sum(t * t, axis=-1, keepdims=True)
    dot = jnp.sum(t * x, axis=-1, keepdims=True)

    a = (dot + eps) / (Rss + eps)

    # Sss = sum((a*t)^2) == a^2 * Rss  (exact algebraically, cheap per-row math).
    Sss = a * a * Rss
    # Keep the explicit residual for Snn (numerically safe vs. the expanded form).
    e = x - a * t
    Snn = jnp.sum(e * e, axis=-1, keepdims=True)

    # log10 of the quotient as a difference of logs: two EUP ops, no divide chain.
    out_ref[...] = 10.0 * (jnp.log10(Sss + eps) - jnp.log10(Snn + eps))


def _choose_block_rows(W: int, R: int, itemsize: int) -> int:
    """Rows per tile: ~_TARGET_TILE_BYTES of (lane-padded) VMEM per input buffer."""
    lanes = -(-W // 128) * 128            # conservative VMEM lane padding for narrow W
    bc = max(8, (_TARGET_TILE_BYTES // (lanes * itemsize)) // 8 * 8)
    # Keep >= _MIN_GRID_STEPS grid steps when the row count allows (megacore + pipeline).
    if R >= _MIN_GRID_STEPS * 8:
        bc = min(bc, max(8, (R // _MIN_GRID_STEPS) // 8 * 8))
    if bc >= R:
        return R                          # single block == full dim (always legal)
    return bc


def _vmem_limit_bytes(tile_bytes: int) -> int:
    """Generation-aware scoped-VMEM request (never above ~75% of physical VMEM)."""
    try:
        cap = int(pltpu.get_tpu_info().vmem_capacity_bytes)
    except Exception:
        cap = 64 * 1024 * 1024            # v7x per-TensorCore capacity (smallest gen)
    needed = 2 * 2 * tile_bytes + (4 << 20)   # 2 inputs x double buffer + slack
    return int(min(max(needed, 32 << 20), (cap * 3) // 4))


def _sisdr_rows(inp_fr: jax.Array, tgt_fr: jax.Array, eps: float) -> jax.Array:
    """Per-row SI-SDR for (R, W) frames in natural layout. Returns (R,) float32."""
    R, W = inp_fr.shape
    itemsize = inp_fr.dtype.itemsize
    bc = _choose_block_rows(W, R, itemsize)
    lanes = -(-W // 128) * 128
    tile_bytes = bc * lanes * itemsize

    grid = (pl.cdiv(R, bc),)
    out = pl.pallas_call(
        functools.partial(_sisdr_kernel, eps=eps),
        out_shape=jax.ShapeDtypeStruct((R, 1), jnp.float32),
        grid=grid,
        in_specs=[
            pl.BlockSpec((bc, W), lambda i: (i, 0)),
            pl.BlockSpec((bc, W), lambda i: (i, 0)),
        ],
        out_specs=pl.BlockSpec((bc, 1), lambda i: (i, 0)),
        compiler_params=pltpu.CompilerParams(
            dimension_semantics=("parallel",),
            vmem_limit_bytes=_vmem_limit_bytes(tile_bytes),
        ),
    )(inp_fr, tgt_fr)
    return out[:, 0]


def _frames(x: jax.Array, ws: int, hop: int) -> jax.Array:
    """torch `x.unfold(-1, ws, hop).reshape(-1, ws)` in natural (R, ws) layout."""
    x2d = x.reshape(-1, x.shape[-1])      # keep source dtype; kernel upcasts to f32
    Bf, T = x2d.shape
    n = (T - ws) // hop + 1
    if hop == ws:
        # overlap == 0: windows are contiguous -> plain (free) reshape, no gather.
        return x2d[:, : n * ws].reshape(Bf * n, ws)
    # TODO(synk): overlap > 0 — read overlapping windows in-kernel (memory_space=pl.ANY
    # + pl.ds offsets) so each sample is fetched once and no gathered copy hits HBM.
    idx = jnp.arange(n)[:, None] * hop + jnp.arange(ws)[None, :]   # (n, ws)
    return jnp.take(x2d, idx, axis=-1).reshape(Bf * n, ws)


def seg_sdr_loss(
    inp: jax.Array,
    tgt: jax.Array,
    window_sizes,
    factor: float = 0.2,
    overlap: float = 0.0,
) -> jax.Array:
    """Equivalent of SegSdrLoss.forward."""
    if factor == 0:
        return jnp.zeros((), jnp.float32)
    eps = float(jnp.finfo(inp.dtype).eps)   # torch.finfo(input.dtype).eps
    hop_frac = 1.0 - overlap
    T = inp.shape[-1]
    loss = jnp.zeros((), jnp.float32)
    # TODO(synk): fuse the per-window-size passes into one kernel so inp/tgt are read
    # from HBM once total instead of once per window size (the tiles can be shared).
    for ws in window_sizes:
        ws = int(ws)
        if ws > T:
            # torch clamps via `ws = input.size(1)`; for 2-D (B, T) inputs that is T.
            ws = T
        hop = int(hop_frac * ws)            # matches torch's int(self.hop * ws)
        sdr = _sisdr_rows(_frames(inp, ws, hop), _frames(tgt, ws, hop), eps)
        loss = loss + jnp.mean(sdr)
    return -loss * factor


if __name__ == "__main__":
    key = jax.random.PRNGKey(0)
    k1, k2 = jax.random.split(key)

    B, T = 2, 64
    window_sizes = [16, 32]
    factor = 0.2
    overlap = 0.0

    target = jax.random.normal(k1, (B, T), dtype=jnp.float32)
    noise = 0.3 * jax.random.normal(k2, (B, T), dtype=jnp.float32)
    inp = target + noise  # "enhanced" signal = target + noise

    loss_fn = jax.jit(functools.partial(
        seg_sdr_loss, window_sizes=window_sizes, factor=factor, overlap=overlap))
    loss = loss_fn(inp, target)
    jax.block_until_ready(loss)

    # pure-JAX reference (original SiSdr formulation) for a sanity check.
    eps = float(jnp.finfo(jnp.float32).eps)

    def _unfold_ref(x, ws, hop):
        x2d = x.reshape(-1, x.shape[-1])
        n = (x2d.shape[-1] - ws) // hop + 1
        idx = jnp.arange(n)[:, None] * hop + jnp.arange(ws)[None, :]
        return jnp.take(x2d, idx, axis=-1).reshape(-1, ws)

    def _ref(inp, tgt):
        total = 0.0
        for ws in window_sizes:
            hop = int((1.0 - overlap) * ws)
            xu = _unfold_ref(inp, ws, hop)
            tu = _unfold_ref(tgt, ws, hop)
            Rss = jnp.sum(tu * tu, -1, keepdims=True)
            a = (jnp.sum(tu * xu, -1, keepdims=True) + eps) / (Rss + eps)
            et = a * tu
            er = xu - et
            sdr = 10.0 * jnp.log10(
                (jnp.sum(et * et, -1) + eps) / (jnp.sum(er * er, -1) + eps))
            total = total + jnp.mean(sdr)
        return -total * factor

    ref = _ref(inp, target)
    assert jnp.allclose(loss, ref, rtol=1e-4, atol=1e-5), (loss, ref)

    print("KERNEL_OK")
</pallas_src>

<mosaic_0001>
module attributes {stable_mosaic.version = 11 : i64} {
  func.func @_sisdr_kernel(%arg0: i32, %arg1: memref<8x16xf32, #tpu.memory_space<vmem>>, %arg2: memref<8x16xf32, #tpu.memory_space<vmem>>, %arg3: memref<8x1xf32, #tpu.memory_space<vmem>>) attributes {dimension_semantics = [#tpu.dimension_semantics<parallel>], iteration_bounds = array<i64: 1>, scalar_prefetch = 0 : i64, scratch_operands = 0 : i64, tpu.core_type = #tpu.core_type<tc>, window_params = [{transform_indices = @transform_0, window_bounds = array<i64: 8, 16>}, {transform_indices = @transform_1, window_bounds = array<i64: 8, 16>}, {transform_indices = @transform_2, window_bounds = array<i64: 8, 1>}]} {
    %c0 = arith.constant 0 : index
    %c0_0 = arith.constant 0 : index
    %0 = vector.load %arg1[%c0, %c0_0] : memref<8x16xf32, #tpu.memory_space<vmem>>, vector<8x16xf32>
    %c0_1 = arith.constant 0 : index
    %c0_2 = arith.constant 0 : index
    %1 = vector.load %arg2[%c0_1, %c0_2] : memref<8x16xf32, #tpu.memory_space<vmem>>, vector<8x16xf32>
    %2 = arith.mulf %1, %1 : vector<8x16xf32>
    %cst = arith.constant dense<0.000000e+00> : vector<8xf32>
    %3 = vector.multi_reduction <add>, %2, %cst [1] : vector<8x16xf32> to vector<8xf32>
    %4 = vector.shape_cast %3 : vector<8xf32> to vector<8x1xf32>
    %5 = arith.mulf %1, %0 : vector<8x16xf32>
    %cst_3 = arith.constant dense<0.000000e+00> : vector<8xf32>
    %6 = vector.multi_reduction <add>, %5, %cst_3 [1] : vector<8x16xf32> to vector<8xf32>
    %7 = vector.shape_cast %6 : vector<8xf32> to vector<8x1xf32>
    %cst_4 = arith.constant 1.1920929E-7 : f32
    %8 = vector.broadcast %cst_4 : f32 to vector<8x1xf32>
    %9 = arith.addf %7, %8 : vector<8x1xf32>
    %cst_5 = arith.constant 1.1920929E-7 : f32
    %10 = vector.broadcast %cst_5 : f32 to vector<8x1xf32>
    %11 = arith.addf %4, %10 : vector<8x1xf32>
    %12 = arith.divf %9, %11 : vector<8x1xf32>
    %13 = arith.mulf %12, %12 : vector<8x1xf32>
    %14 = arith.mulf %13, %4 : vector<8x1xf32>
    %15 = vector.broadcast %12 : vector<8x1xf32> to vector<8x16xf32>
    %16 = arith.mulf %15, %1 : vector<8x16xf32>
    %17 = arith.subf %0, %16 : vector<8x16xf32>
    %18 = arith.mulf %17, %17 : vector<8x16xf32>
    %cst_6 = arith.constant dense<0.000000e+00> : vector<8xf32>
    %19 = vector.multi_reduction <add>, %18, %cst_6 [1] : vector<8x16xf32> to vector<8xf32>
    %20 = vector.shape_cast %19 : vector<8xf32> to vector<8x1xf32>
    %cst_7 = arith.constant 1.1920929E-7 : f32
    %21 = vector.broadcast %cst_7 : f32 to vector<8x1xf32>
    %22 = arith.addf %14, %21 : vector<8x1xf32>
    %23 = math.log %22 : vector<8x1xf32>
    %cst_8 = arith.constant 0.434294492 : f32
    %24 = vector.broadcast %cst_8 : f32 to vector<8x1xf32>
    %25 = arith.mulf %23, %24 : vector<8x1xf32>
    %cst_9 = arith.constant 1.1920929E-7 : f32
    %26 = vector.broadcast %cst_9 : f32 to vector<8x1xf32>
    %27 = arith.addf %20, %26 : vector<8x1xf32>
    %28 = math.log %27 : vector<8x1xf32>
    %cst_10 = arith.constant 0.434294492 : f32
    %29 = vector.broadcast %cst_10 : f32 to vector<8x1xf32>
    %30 = arith.mulf %28, %29 : vector<8x1xf32>
    %31 = arith.subf %25, %30 : vector<8x1xf32>
    %cst_11 = arith.constant 1.000000e+01 : f32
    %32 = vector.broadcast %cst_11 : f32 to vector<8x1xf32>
    %33 = arith.mulf %32, %31 : vector<8x1xf32>
    %c0_12 = arith.constant 0 : index
    %c0_13 = arith.constant 0 : index
    %34 = vector.load %arg3[%c0_12, %c0_13] : memref<8x1xf32, #tpu.memory_space<vmem>>, vector<8x1xf32>
    tpu.vector_store %arg3[%c0_12, %c0_13], %33 {strides = array<i32>} : memref<8x1xf32, #tpu.memory_space<vmem>>, vector<8x1xf32>,
    return
  }
  func.func @transform_0(%arg0: i32) -> (i32, i32) {
    %c0_i32 = arith.constant 0 : i32
    %c0_i32_0 = arith.constant 0 : i32
    return %arg0, %c0_i32 : i32, i32
  }
  func.func @transform_1(%arg0: i32) -> (i32, i32) {
    %c0_i32 = arith.constant 0 : i32
    %c0_i32_0 = arith.constant 0 : i32
    return %arg0, %c0_i32 : i32, i32
  }
  func.func @transform_2(%arg0: i32) -> (i32, i32) {
    %c0_i32 = arith.constant 0 : i32
    %c0_i32_0 = arith.constant 0 : i32
    return %arg0, %c0_i32 : i32, i32
  }
}

module attributes {stable_mosaic.version = 11 : i64} {
  func.func @_sisdr_kernel(%arg0: i32, %arg1: memref<4x32xf32, #tpu.memory_space<vmem>>, %arg2: memref<4x32xf32, #tpu.memory_space<vmem>>, %arg3: memref<4x1xf32, #tpu.memory_space<vmem>>) attributes {dimension_semantics = [#tpu.dimension_semantics<parallel>], iteration_bounds = array<i64: 1>, scalar_prefetch = 0 : i64, scratch_operands = 0 : i64, tpu.core_type = #tpu.core_type<tc>, window_params = [{transform_indices = @transform_0, window_bounds = array<i64: 4, 32>}, {transform_indices = @transform_1, window_bounds = array<i64: 4, 32>}, {transform_indices = @transform_2, window_bounds = array<i64: 4, 1>}]} {
    %c0 = arith.constant 0 : index
    %c0_0 = arith.constant 0 : index
    %0 = vector.load %arg1[%c0, %c0_0] : memref<4x32xf32, #tpu.memory_space<vmem>>, vector<4x32xf32>
    %c0_1 = arith.constant 0 : index
    %c0_2 = arith.constant 0 : index
    %1 = vector.load %arg2[%c0_1, %c0_2] : memref<4x32xf32, #tpu.memory_space<vmem>>, vector<4x32xf32>
    %2 = arith.mulf %1, %1 : vector<4x32xf32>
    %cst = arith.constant dense<0.000000e+00> : vector<4xf32>
    %3 = vector.multi_reduction <add>, %2, %cst [1] : vector<4x32xf32> to vector<4xf32>
    %4 = vector.shape_cast %3 : vector<4xf32> to vector<4x1xf32>
    %5 = arith.mulf %1, %0 : vector<4x32xf32>
    %cst_3 = arith.constant dense<0.000000e+00> : vector<4xf32>
    %6 = vector.multi_reduction <add>, %5, %cst_3 [1] : vector<4x32xf32> to vector<4xf32>
    %7 = vector.shape_cast %6 : vector<4xf32> to vector<4x1xf32>
    %cst_4 = arith.constant 1.1920929E-7 : f32
    %8 = vector.broadcast %cst_4 : f32 to vector<4x1xf32>
    %9 = arith.addf %7, %8 : vector<4x1xf32>
    %cst_5 = arith.constant 1.1920929E-7 : f32
    %10 = vector.broadcast %cst_5 : f32 to vector<4x1xf32>
    %11 = arith.addf %4, %10 : vector<4x1xf32>
    %12 = arith.divf %9, %11 : vector<4x1xf32>
    %13 = arith.mulf %12, %12 : vector<4x1xf32>
    %14 = arith.mulf %13, %4 : vector<4x1xf32>
    %15 = vector.broadcast %12 : vector<4x1xf32> to vector<4x32xf32>
    %16 = arith.mulf %15, %1 : vector<4x32xf32>
    %17 = arith.subf %0, %16 : vector<4x32xf32>
    %18 = arith.mulf %17, %17 : vector<4x32xf32>
    %cst_6 = arith.constant dense<0.000000e+00> : vector<4xf32>
    %19 = vector.multi_reduction <add>, %18, %cst_6 [1] : vector<4x32xf32> to vector<4xf32>
    %20 = vector.shape_cast %19 : vector<4xf32> to vector<4x1xf32>
    %cst_7 = arith.constant 1.1920929E-7 : f32
    %21 = vector.broadcast %cst_7 : f32 to vector<4x1xf32>
    %22 = arith.addf %14, %21 : vector<4x1xf32>
    %23 = math.log %22 : vector<4x1xf32>
    %cst_8 = arith.constant 0.434294492 : f32
    %24 = vector.broadcast %cst_8 : f32 to vector<4x1xf32>
    %25 = arith.mulf %23, %24 : vector<4x1xf32>
    %cst_9 = arith.constant 1.1920929E-7 : f32
    %26 = vector.broadcast %cst_9 : f32 to vector<4x1xf32>
    %27 = arith.addf %20, %26 : vector<4x1xf32>
    %28 = math.log %27 : vector<4x1xf32>
    %cst_10 = arith.constant 0.434294492 : f32
    %29 = vector.broadcast %cst_10 : f32 to vector<4x1xf32>
    %30 = arith.mulf %28, %29 : vector<4x1xf32>
    %31 = arith.subf %25, %30 : vector<4x1xf32>
    %cst_11 = arith.constant 1.000000e+01 : f32
    %32 = vector.broadcast %cst_11 : f32 to vector<4x1xf32>
    %33 = arith.mulf %32, %31 : vector<4x1xf32>
    %c0_12 = arith.constant 0 : index
    %c0_13 = arith.constant 0 : index
    %34 = vector.load %arg3[%c0_12, %c0_13] : memref<4x1xf32, #tpu.memory_space<vmem>>, vector<4x1xf32>
    tpu.vector_store %arg3[%c0_12, %c0_13], %33 {strides = array<i32>} : memref<4x1xf32, #tpu.memory_space<vmem>>, vector<4x1xf32>,
    return
  }
  func.func @transform_0(%arg0: i32) -> (i32, i32) {
    %c0_i32 = arith.constant 0 : i32
    %c0_i32_0 = arith.constant 0 : i32
    return %arg0, %c0_i32 : i32, i32
  }
  func.func @transform_1(%arg0: i32) -> (i32, i32) {
    %c0_i32 = arith.constant 0 : i32
    %c0_i32_0 = arith.constant 0 : i32
    return %arg0, %c0_i32 : i32, i32
  }
  func.func @transform_2(%arg0: i32) -> (i32, i32) {
    %c0_i32 = arith.constant 0 : i32
    %c0_i32_0 = arith.constant 0 : i32
    return %arg0, %c0_i32 : i32, i32
  }
}

</mosaic_0001>

<llo_original>
// kernel: seg_sdr_loss.2
$region0: #{seg_sdr_loss.2}
  #allocation0 [shape = 'u32[]', space=smem, size = 0x4, offset = 0x4, fixed_abs, tag = 'smem constant byte address 0x4 - core index']
  #allocation1 [shape = 'u32[144,128]{1,0:T(1,128)}', space=vmem, size = 0x12000, scoped, tag = 'internal scratch']
  %s0 = inlined_call_operand.vmem [shape: f32[8,16], index: 0, kind: input, shape index: {}]
  %s1 = inlined_call_operand.vmem [shape: f32[8,16], index: 1, kind: input, shape index: {}]
  %s2 = inlined_call_operand.vmem [shape: f32[8,1], index: 2, kind: output, shape index: {}]
  %s3 = sld [smem:[#allocation0]]
  $region18: #{seg_sdr_loss.2} parent=0
    _
  %s5 = ssub.s32 1, %s3
  %s6 = scalar_select 0, %s5, %s3
  // Predicated region
  $region2: #{seg_sdr_loss.2} parent=0 // pred_check
    _
  $region3: #{seg_sdr_loss.2} parent=0 // pred_check_branch
    %8 = sbr.rel (0) target = $region5
  $region4: #{seg_sdr_loss.2} parent=0 // pred_region
    _
  $region5: #{seg_sdr_loss.2} parent=0 // pred_fallthru
    _
  // Predicated region
  $region6: #{seg_sdr_loss.2} parent=0 // pred_check
    _
  $region7: #{seg_sdr_loss.2} parent=0 // pred_check_branch
    %10 = sbr.rel (0) target = $region9
  $region8: #{seg_sdr_loss.2} parent=0 // pred_region
    _
  $region9: #{seg_sdr_loss.2} parent=0 // pred_fallthru
    _
  %v11 = vld [vmem:[%s0] sm:$0xff]
  %v12 = vld [vmem:[%s1] sm:$0xff]
  %v13 = vmul.f32 %v12, %v12
  %vm14 = vcmask 130048
  %v15 = vsel %vm14, %v13, 0.0
  %16 = vadd.xlane.f32.xlu0 %v15
  %v17 = vpop.xlane.xlu0 %16
  %v18 = vmul.f32 %v12, %v11
  %v19 = vsel %vm14, %v18, 0.0
  %20 = vadd.xlane.f32.xlu0 %v19
  %v21 = vpop.xlane.xlu0 %20
  %v22 = vadd.f32 %v21, 1.1920929e-07
  %v23 = vadd.f32 %v17, 1.1920929e-07
  %v24 = vrcp.pop %v23
  %v25 = vmul.f32 %v22, %v24
  %v26 = vmul.f32 %v25, %v25
  %v27 = vmul.f32 %v26, %v17
  %v28 = vmul.f32 %v25, %v12
  %v29 = vsub.f32 %v11, %v28
  %v30 = vmul.f32 %v29, %v29
  %v31 = vsel %vm14, %v30, 0.0
  %32 = vadd.xlane.f32.xlu0 %v31
  %v33 = vpop.xlane.xlu0 %32
  %v34 = vadd.f32 %v27, 1.1920929e-07
  %v35 = vlog2.pop %v34
  %v36 = vmul.f32 %v35, 0.6931472
  %v37 = vmul.f32 %v36, 0.4342945
  %v38 = vadd.f32 %v33, 1.1920929e-07
  %v39 = vlog2.pop %v38
  %v40 = vmul.f32 %v39, 0.6931472
  %v41 = vmul.f32 %v40, 0.4342945
  %v42 = vsub.f32 %v37, %v41
  %v43 = vmul.f32 %v42, 10.0
  %vm44 = vcmask 7168
  %45 = vst.msk [vmem:[%s2] sm:$0xff] %vm44, %v43
  // Predicated region
  $region10: #{seg_sdr_loss.2} parent=0 // pred_check
    _
  $region11: #{seg_sdr_loss.2} parent=0 // pred_check_branch
    %47 = sbr.rel (0) target = $region13
  $region12: #{seg_sdr_loss.2} parent=0 // pred_region
    _
  $region13: #{seg_sdr_loss.2} parent=0 // pred_fallthru
    _
  // Predicated region
  $region14: #{seg_sdr_loss.2} parent=0 // pred_check
    _
  $region15: #{seg_sdr_loss.2} parent=0 // pred_check_branch
    %49 = sbr.rel (0) target = $region17
  $region16: #{seg_sdr_loss.2} parent=0 // pred_region
    _
  $region17: #{seg_sdr_loss.2} parent=0 // pred_fallthru
    _

// kernel: seg_sdr_loss.3
$region0: #{seg_sdr_loss.3}
  #allocation0 [shape = 'u32[]', space=smem, size = 0x4, offset = 0x4, fixed_abs, tag = 'smem constant byte address 0x4 - core index']
  #allocation1 [shape = 'u32[144,128]{1,0:T(1,128)}', space=vmem, size = 0x12000, scoped, tag = 'internal scratch']
  %s0 = inlined_call_operand.vmem [shape: f32[4,32], index: 0, kind: input, shape index: {}]
  %s1 = inlined_call_operand.vmem [shape: f32[4,32], index: 1, kind: input, shape index: {}]
  %s2 = inlined_call_operand.vmem [shape: f32[4,1], index: 2, kind: output, shape index: {}]
  %s3 = sld [smem:[#allocation0]]
  $region18: #{seg_sdr_loss.3} parent=0
    _
  %s5 = ssub.s32 1, %s3
  %s6 = scalar_select 0, %s5, %s3
  // Predicated region
  $region2: #{seg_sdr_loss.3} parent=0 // pred_check
    _
  $region3: #{seg_sdr_loss.3} parent=0 // pred_check_branch
    %8 = sbr.rel (0) target = $region5
  $region4: #{seg_sdr_loss.3} parent=0 // pred_region
    _
  $region5: #{seg_sdr_loss.3} parent=0 // pred_fallthru
    _
  // Predicated region
  $region6: #{seg_sdr_loss.3} parent=0 // pred_check
    _
  $region7: #{seg_sdr_loss.3} parent=0 // pred_check_branch
    %10 = sbr.rel (0) target = $region9
  $region8: #{seg_sdr_loss.3} parent=0 // pred_region
    _
  $region9: #{seg_sdr_loss.3} parent=0 // pred_fallthru
    _
  %v11 = vld [vmem:[%s0] sm:$0xf]
  %v12 = vld [vmem:[%s1] sm:$0xf]
  %v13 = vmul.f32 %v12, %v12
  %vm14 = vcmask 257024
  %v15 = vsel %vm14, %v13, 0.0
  %16 = vadd.xlane.f32.xlu0 %v15
  %v17 = vpop.xlane.xlu0 %16
  %v18 = vmul.f32 %v12, %v11
  %v19 = vsel %vm14, %v18, 0.0
  %20 = vadd.xlane.f32.xlu0 %v19
  %v21 = vpop.xlane.xlu0 %20
  %v22 = vadd.f32 %v21, 1.1920929e-07
  %v23 = vadd.f32 %v17, 1.1920929e-07
  %v24 = vrcp.pop %v23
  %v25 = vmul.f32 %v22, %v24
  %v26 = vmul.f32 %v25, %v25
  %v27 = vmul.f32 %v26, %v17
  %v28 = vmul.f32 %v25, %v12
  %v29 = vsub.f32 %v11, %v28
  %v30 = vmul.f32 %v29, %v29
  %v31 = vsel %vm14, %v30, 0.0
  %32 = vadd.xlane.f32.xlu0 %v31
  %v33 = vpop.xlane.xlu0 %32
  %v34 = vadd.f32 %v27, 1.1920929e-07
  %v35 = vlog2.pop %v34
  %v36 = vmul.f32 %v35, 0.6931472
  %v37 = vmul.f32 %v36, 0.4342945
  %v38 = vadd.f32 %v33, 1.1920929e-07
  %v39 = vlog2.pop %v38
  %v40 = vmul.f32 %v39, 0.6931472
  %v41 = vmul.f32 %v40, 0.4342945
  %v42 = vsub.f32 %v37, %v41
  %v43 = vmul.f32 %v42, 10.0
  %vm44 = vcmask 3072
  %45 = vst.msk [vmem:[%s2] sm:$0xf] %vm44, %v43
  // Predicated region
  $region10: #{seg_sdr_loss.3} parent=0 // pred_check
    _
  $region11: #{seg_sdr_loss.3} parent=0 // pred_check_branch
    %47 = sbr.rel (0) target = $region13
  $region12: #{seg_sdr_loss.3} parent=0 // pred_region
    _
  $region13: #{seg_sdr_loss.3} parent=0 // pred_fallthru
    _
  // Predicated region
  $region14: #{seg_sdr_loss.3} parent=0 // pred_check
    _
  $region15: #{seg_sdr_loss.3} parent=0 // pred_check_branch
    %49 = sbr.rel (0) target = $region17
  $region16: #{seg_sdr_loss.3} parent=0 // pred_region
    _
  $region17: #{seg_sdr_loss.3} parent=0 // pred_fallthru
    _

</llo_original>
